<compile_context>
chip_gen: v7x
topology: tpu7x:2x2x1
jax: 0.10.0
libtpu: 0.0.40
codegen_flags: <defaults>
</compile_context>

<pallas_src>
import jax
import jax.numpy as jnp
from jax.experimental import pallas as pl
from jax.experimental.pallas import tpu as pltpu


def gate_kernel(x_ref, w_ref, thr_ref, out_ref):
    """One grid step: (TM, D) token tile -> (TM, 2) hard-gate tile.

    x_ref:   (TM, D) VMEM, activation dtype (f32 or bf16)
    w_ref:   (D, 1)  VMEM, resident (constant block index across the grid)
    thr_ref: (1,)    SMEM f32, logit-space threshold with the bias folded in
    out_ref: (TM, 2) VMEM f32, [:, 0] = skip_tk, [:, 1] = tk
    """
    # Single MXU matvec, f32 accumulation regardless of input dtype.
    logits = jnp.dot(x_ref[...], w_ref[...],
                     preferred_element_type=jnp.float32)           # (TM, 1)
    # sigmoid(logits + bias) <= t  <=>  logits <= logit(t) - bias.
    keep = (logits <= thr_ref[0]).astype(jnp.float32)              # tk
    # One full-tile store (skip_tk is the exact complement of tk).
    out_ref[...] = jnp.concatenate([1.0 - keep, keep], axis=-1)


def _sublane_multiple(dtype):
    """Minimum row multiple for the (sublane, lane) layout of this dtype."""
    itemsize = jnp.dtype(dtype).itemsize
    return max(8, 32 // itemsize)        # 8 for f32, 16 for bf16, 32 for int8/fp8


def _chip_budgets():
    """Per-buffer x-tile byte budget and (optional) scoped-VMEM limit per chip gen."""
    try:
        kind = jax.devices()[0].device_kind.lower()
    except Exception:  # pragma: no cover - CPU/interpret fallbacks
        kind = ""
    if "v7" in kind:
        # 64 MiB physical VMEM per TC, 32 MiB scoped default: 2 x 14 MiB double-
        # buffered x + weight/output needs the limit raised, keep headroom.
        return 14 << 20, 48 << 20
    if "v6" in kind:
        # 128 MiB physical, 32 MiB scoped default: 2 x 10 MiB fits without flags.
        return 10 << 20, 32 << 20
    # v5e (16 MiB scoped default) or unknown backend: stay conservative.
    return 4 << 20, None


def _pick_tile_m(M, D, dtype, tile_m=None, budget_bytes=None):
    """Row tile sized by a per-buffer byte budget, rounded to 512 (or the dtype
    sublane minimum), clamped to cover M for tiny inputs."""
    itemsize = jnp.dtype(dtype).itemsize
    sub = _sublane_multiple(dtype)
    if tile_m is None:
        budget = (4 << 20) if budget_bytes is None else budget_bytes
        tile_m = max(sub, budget // (D * itemsize))
        if tile_m >= 512:
            tile_m = (tile_m // 512) * 512          # keep DMA / vreg tiling aligned
        else:
            tile_m = max(sub, (tile_m // sub) * sub)
    else:
        # Respect a user-forced tile but enforce the dtype sublane minimum.
        tile_m = max(sub, ((tile_m + sub - 1) // sub) * sub)
    if tile_m > M:
        tile_m = ((M + sub - 1) // sub) * sub       # round M up to the sublane multiple
    return tile_m


def gate_forward(x, weight, bias, threshold, tile_m=None):
    """x: (B, N, D); weight: (1, D) (PyTorch Linear layout); bias: scalar."""
    B, N, D = x.shape
    M = B * N
    x2 = x.reshape(M, D)                                           # no dtype upcast
    w2 = jnp.asarray(weight).reshape(1, D).T.astype(x2.dtype)      # (D, 1)

    # Fold sigmoid + bias into a single logit-space threshold scalar (SMEM).
    thr = jnp.asarray(threshold, jnp.float32)
    bias_f = jnp.asarray(bias, jnp.float32)
    thr_logit = (jnp.log(thr) - jnp.log1p(-thr) - bias_f).astype(jnp.float32).reshape(1)

    budget_bytes, vmem_limit = _chip_budgets()
    TM = _pick_tile_m(M, D, x2.dtype, tile_m=tile_m, budget_bytes=budget_bytes)
    grid = (pl.cdiv(M, TM),)

    itemsize = x2.dtype.itemsize
    cost = pl.CostEstimate(
        flops=2 * M * D,
        transcendentals=0,
        bytes_accessed=M * D * itemsize + 8 * M + D * itemsize,
    )

    out = pl.pallas_call(
        gate_kernel,
        out_shape=jax.ShapeDtypeStruct((M, 2), jnp.float32),
        grid=grid,
        in_specs=[
            pl.BlockSpec((TM, D), lambda i: (i, 0)),                   # x tile (pipelined)
            pl.BlockSpec((D, 1), lambda i: (0, 0)),                    # weight, resident
            pl.BlockSpec(memory_space=pltpu.MemorySpace.SMEM),         # threshold scalar
        ],
        out_specs=pl.BlockSpec((TM, 2), lambda i: (i, 0)),
        compiler_params=pltpu.CompilerParams(
            dimension_semantics=("parallel",),      # shard tiles across TCs (v7x megacore)
            vmem_limit_bytes=vmem_limit,
        ),
        cost_estimate=cost,
    )(x2, w2, thr_logit)
    return out.reshape(B, N, 2)


def gate_reference(x, weight, bias, threshold):
    logits = jnp.einsum("bnd,d->bn", x.astype(jnp.float32),
                        jnp.asarray(weight, jnp.float32).reshape(-1)) + bias
    prob = jax.nn.sigmoid(logits)[..., None]
    skip = (prob > threshold).astype(jnp.float32)
    keep = (prob <= threshold).astype(jnp.float32)
    return jnp.concatenate([skip, keep], axis=-1)


if __name__ == "__main__":
    # Small shapes: batch=2, seq=8, in_dim=32
    B, N, D = 2, 8, 32
    key = jax.random.PRNGKey(0)
    kx, kw, kb = jax.random.split(key, 3)

    x = jax.random.normal(kx, (B, N, D), dtype=jnp.float32)
    # Deterministic "Linear(in_dim, 1)" parameters (synthetic, not a checkpoint).
    bound = 1.0 / (D ** 0.5)
    weight = jax.random.uniform(kw, (1, D), minval=-bound, maxval=bound, dtype=jnp.float32)
    bias = jax.random.uniform(kb, (), minval=-bound, maxval=bound, dtype=jnp.float32)

    target_threshold = 0.9   # eval mode uses the `threshold` buffer

    ref = gate_reference(x, weight, bias, target_threshold)

    # Default tile (single grid step at this toy size).
    out = jax.block_until_ready(gate_forward(x, weight, bias, target_threshold))
    assert out.shape == (B, N, 2), out.shape
    assert jnp.allclose(out, ref, atol=1e-6), "mismatch vs reference (default tile)"

    # Forced small tile to exercise the multi-step pipelined grid path.
    out_tiled = jax.block_until_ready(
        gate_forward(x, weight, bias, target_threshold, tile_m=8))
    assert jnp.allclose(out_tiled, ref, atol=1e-6), "mismatch vs reference (tiled)"

    print("KERNEL_OK")
</pallas_src>

<mosaic_0001>
module attributes {stable_mosaic.version = 11 : i64} {
  func.func @gate_kernel(%arg0: i32, %arg1: memref<16x32xf32, #tpu.memory_space<vmem>>, %arg2: memref<32x1xf32, #tpu.memory_space<vmem>>, %arg3: memref<1xf32, #tpu.memory_space<smem>>, %arg4: memref<16x2xf32, #tpu.memory_space<vmem>>) attributes {dimension_semantics = [#tpu.dimension_semantics<parallel>], iteration_bounds = array<i64: 1>, scalar_prefetch = 0 : i64, scratch_operands = 0 : i64, tpu.core_type = #tpu.core_type<tc>, window_params = [{transform_indices = @transform_0, window_bounds = array<i64: 16, 32>}, {pipeline_mode = #tpu.pipeline_mode<synchronous>, transform_indices = @transform_1, window_bounds = array<i64: 32, 1>}, {transform_indices = @transform_2, window_bounds = array<i64: 1>}, {transform_indices = @transform_3, window_bounds = array<i64: 16, 2>}]} {
    %c0 = arith.constant 0 : index
    %c0_0 = arith.constant 0 : index
    %0 = vector.load %arg1[%c0, %c0_0] : memref<16x32xf32, #tpu.memory_space<vmem>>, vector<16x32xf32>
    %c0_1 = arith.constant 0 : index
    %c0_2 = arith.constant 0 : index
    %1 = vector.load %arg2[%c0_1, %c0_2] : memref<32x1xf32, #tpu.memory_space<vmem>>, vector<32x1xf32>
    %cst = arith.constant dense<0.000000e+00> : vector<16x1xf32>
    %2 = tpu.matmul %0, %1, %cst {dimension_numbers = #tpu.dot_dimension_numbers<[1], [0], [0], [1], [0, 0, 1, 1], [], []>} : vector<16x32xf32>, vector<32x1xf32>, vector<16x1xf32> -> vector<16x1xf32>
    %c0_3 = arith.constant 0 : index
    %3 = memref.load %arg3[%c0_3] : memref<1xf32, #tpu.memory_space<smem>>
    %4 = vector.broadcast %3 : f32 to vector<16x1xf32>
    %5 = arith.cmpf ole, %2, %4 : vector<16x1xf32>
    %6 = arith.extui %5 : vector<16x1xi1> to vector<16x1xi32>
    %7 = arith.sitofp %6 : vector<16x1xi32> to vector<16x1xf32>
    %cst_4 = arith.constant 1.000000e+00 : f32
    %8 = vector.broadcast %cst_4 : f32 to vector<16x1xf32>
    %9 = arith.subf %8, %7 : vector<16x1xf32>
    %10 = tpu.concatenate %9, %7 in 1 : vector<16x1xf32>, vector<16x1xf32> -> vector<16x2xf32>
    %c0_5 = arith.constant 0 : index
    %c0_6 = arith.constant 0 : index
    %11 = vector.load %arg4[%c0_5, %c0_6] : memref<16x2xf32, #tpu.memory_space<vmem>>, vector<16x2xf32>
    tpu.vector_store %arg4[%c0_5, %c0_6], %10 {strides = array<i32>} : memref<16x2xf32, #tpu.memory_space<vmem>>, vector<16x2xf32>,
    return
  }
  func.func @transform_0(%arg0: i32) -> (i32, i32) {
    %c0_i32 = arith.constant 0 : i32
    %c0_i32_0 = arith.constant 0 : i32
    return %arg0, %c0_i32 : i32, i32
  }
  func.func @transform_1(%arg0: i32) -> (i32, i32) {
    %c0_i32 = arith.constant 0 : i32
    %c0_i32_0 = arith.constant 0 : i32
    %c0_i32_1 = arith.constant 0 : i32
    return %c0_i32, %c0_i32_0 : i32, i32
  }
  func.func @transform_2(%arg0: i32) -> i32 {
    %c0_i32 = arith.constant 0 : i32
    %c0_i32_0 = arith.constant 0 : i32
    return %c0_i32 : i32
  }
  func.func @transform_3(%arg0: i32) -> (i32, i32) {
    %c0_i32 = arith.constant 0 : i32
    %c0_i32_0 = arith.constant 0 : i32
    return %arg0, %c0_i32 : i32, i32
  }
}

</mosaic_0001>

<llo_original>
// kernel: tpu_custom_call.1
$region0: #{tpu_custom_call.1}
  #allocation0 [shape = 'u32[]', space=smem, size = 0x4, offset = 0x4, fixed_abs, tag = 'smem constant byte address 0x4 - core index']
  #allocation1 [shape = 'u32[144,128]{1,0:T(1,128)}', space=vmem, size = 0x12000, scoped, tag = 'internal scratch']
  #allocation2 [shape = 'f32[1]{0:T(128)S(6)}', space=smem, size = 0x200, scoped, tag = 'scoped memory for tpu_custom_call.1']
  %s0 = inlined_call_operand.vmem [shape: f32[16,32], index: 0, kind: input, shape index: {}]
  %s1 = inlined_call_operand.vmem [shape: f32[32,1], index: 1, kind: input, shape index: {}]
  %s2 = inlined_call_operand.<no memory space> [shape: f32[1], index: 2, kind: input, shape index: {}]
  %s3 = inlined_call_operand.vmem [shape: f32[16,2], index: 3, kind: output, shape index: {}]
  %s4 = sld [smem:[#allocation0]]
  $region22: #{tpu_custom_call.1} parent=0
    _
  %s6 = ssub.s32 1, %s4
  %s7 = scalar_select 0, %s6, %s4
  %8 = sst [smem:[#allocation2]] %s2
  // Predicated region
  $region2: #{tpu_custom_call.1} parent=0 // pred_check
    _
  $region3: #{tpu_custom_call.1} parent=0 // pred_check_branch
    %10 = sbr.rel (0) target = $region5
  $region4: #{tpu_custom_call.1} parent=0 // pred_region
    _
  $region5: #{tpu_custom_call.1} parent=0 // pred_fallthru
    _
  // Predicated region
  $region6: #{tpu_custom_call.1} parent=0 // pred_check
    _
  $region7: #{tpu_custom_call.1} parent=0 // pred_check_branch
    %12 = sbr.rel (0) target = $region9
  $region8: #{tpu_custom_call.1} parent=0 // pred_region
    _
  $region9: #{tpu_custom_call.1} parent=0 // pred_fallthru
    _
  // Predicated region
  $region10: #{tpu_custom_call.1} parent=0 // pred_check
    _
  $region11: #{tpu_custom_call.1} parent=0 // pred_check_branch
    %14 = sbr.rel (0) target = $region13
  $region12: #{tpu_custom_call.1} parent=0 // pred_region
    _
  $region13: #{tpu_custom_call.1} parent=0 // pred_fallthru
    _
  %v15 = vld [vmem:[%s0] sm:$0xff]
  %v16 = vld [vmem:[%s0 + $0x8] sm:$0xff]
  %v17 = vld [vmem:[%s1] sm:$0xff]
  %v18 = vld [vmem:[%s1 + $0x8] sm:$0xff]
  %v19 = vld [vmem:[%s1 + $0x10] sm:$0xff]
  %v20 = vld [vmem:[%s1 + $0x18] sm:$0xff]
  %vm21 = vcmask 261120
  %v23 = vsel %vm21, %v15, 0
  %v26 = vsel %vm21, %v16, 0
  %28 = vmatprep.subr.mxu0 0.0
  %29 = vmatpush1.msra.mxu0 %v17
  %30 = vmatprep.subr.mxu0 0.0
  %31 = vmatpush1.msra.mxu0 %v18
  %32 = vmatprep.subr.mxu0 0.0
  %33 = vmatpush1.msra.mxu0 %v19
  %34 = vmatprep.subr.mxu0 0.0
  %35 = vmatpush1.msra.mxu0 %v20
  %36 = vmatprep.subr.mxu0 0.0
  %37 = vmatpush1.msra.mxu0 0.0
  %38 = vmatprep.subr.mxu0 0.0
  %39 = vmatpush1.msra.mxu0 0.0
  %40 = vmatprep.subr.mxu0 0.0
  %41 = vmatpush1.msra.mxu0 0.0
  %42 = vmatprep.subr.mxu0 0.0
  %43 = vmatpush1.msra.mxu0 0.0
  %44 = vmatprep.subr.mxu0 0.0
  %45 = vmatpush1.msra.mxu0 0.0
  %46 = vmatprep.subr.mxu0 0.0
  %47 = vmatpush1.msra.mxu0 0.0
  %48 = vmatprep.subr.mxu0 0.0
  %49 = vmatpush1.msra.mxu0 0.0
  %50 = vmatprep.subr.mxu0 0.0
  %51 = vmatpush1.msra.mxu0 0.0
  %52 = vmatprep.subr.mxu0 0.0
  %53 = vmatpush1.msra.mxu0 0.0
  %54 = vmatprep.subr.mxu0 0.0
  %55 = vmatpush1.msra.mxu0 0.0
  %56 = vmatprep.subr.mxu0 0.0
  %57 = vmatpush1.msra.mxu0 0.0
  %58 = vmatprep.subr.mxu0 0.0
  %59 = vmatpush1.msra.mxu0 0.0
  %60 = vmatprep.subr.mxu0 0.0
  %61 = vmatpush1.msra.mxu0 0.0
  %62 = vmatprep.subr.mxu0 0.0
  %63 = vmatpush1.msra.mxu0 0.0
  %64 = vmatprep.subr.mxu0 0.0
  %65 = vmatpush1.msra.mxu0 0.0
  %66 = vmatprep.subr.mxu0 0.0
  %67 = vmatpush1.msra.mxu0 0.0
  %68 = vmatprep.subr.mxu0 0.0
  %69 = vmatpush1.msra.mxu0 0.0
  %70 = vmatprep.subr.mxu0 0.0
  %71 = vmatpush1.msra.mxu0 0.0
  %72 = vmatprep.subr.mxu0 0.0
  %73 = vmatpush1.msra.mxu0 0.0
  %74 = vmatprep.subr.mxu0 0.0
  %75 = vmatpush1.msra.mxu0 0.0
  %76 = vmatprep.subr.mxu0 0.0
  %77 = vmatpush1.msra.mxu0 0.0
  %78 = vmatprep.subr.mxu0 0.0
  %79 = vmatpush1.msra.mxu0 0.0
  %80 = vmatprep.subr.mxu0 0.0
  %81 = vmatpush1.msra.mxu0 0.0
  %82 = vmatprep.subr.mxu0 0.0
  %83 = vmatpush1.msra.mxu0 0.0
  %84 = vmatprep.subr.mxu0 0.0
  %85 = vmatpush1.msra.mxu0 0.0
  %86 = vmatprep.subr.mxu0 0.0
  %87 = vmatpush1.msra.mxu0 0.0
  %88 = vmatprep.subr.mxu0 0.0
  %89 = vmatpush1.msra.mxu0 0.0
  %90 = vmatprep.subr.mxu0 0.0
  %91 = vmatpush1.msra.mxu0 0.0
  %92 = vmatprep.mubr.f32.mxu0 0.0
  %93 = vmatmul.mubr.f32.gmra.mrb[0].mxu0 %v23
  %v94 = vpop.f32.mrb[0].mxu0
  %v95 = vadd.f32 0.0, %v94
  %v96 = vpop.f32.mrb[0].mxu0
  %97 = vmatprep.mubr.f32.mxu0 0.0
  %98 = vmatmul.mubr.f32.gmra.mrb[0].mxu0 %v26
  %v99 = vpop.f32.mrb[0].mxu0
  %v100 = vadd.f32 0.0, %v99
  %v101 = vpop.f32.mrb[0].mxu0
  %102 = vdwg.mxu0
  %s103 = sld [smem:[#allocation2]]
  %v104 = vstv %s103
  %vm105 = vcmp.le.f32.partialorder %v95, %v104
  %vm106 = vcmp.le.f32.partialorder %v100, %v104
  %v107 = vsel %vm105, 1, 0
  %v108 = vsel %vm106, 1, 0
  %v109 = vcvt.s32.f32 %v107
  %v110 = vcvt.s32.f32 %v108
  %v111 = vsub.f32 1.0, %v109
  %v112 = vsub.f32 1.0, %v110
  %115 = vrot.lane.b32.xlu0 %v109, 1
  %v116 = vpop.permute.xlu0 %115
  %117 = vrot.lane.b32.xlu0 %v110, 1
  %v118 = vpop.permute.xlu0 %117
  %vm121 = vcmask 7168
  %v122 = vsel %vm121, %v111, %v116
  %v123 = vsel %vm121, %v112, %v118
  %vm124 = vcmask 15360
  %125 = vst.msk [vmem:[%s3] sm:$0xff] %vm124, %v122
  %126 = vst.msk [vmem:[%s3 + $0x8] sm:$0xff] %vm124, %v123
  // Predicated region
  $region14: #{tpu_custom_call.1} parent=0 // pred_check
    _
  $region15: #{tpu_custom_call.1} parent=0 // pred_check_branch
    %128 = sbr.rel (0) target = $region17
  $region16: #{tpu_custom_call.1} parent=0 // pred_region
    _
  $region17: #{tpu_custom_call.1} parent=0 // pred_fallthru
    _
  // Predicated region
  $region18: #{tpu_custom_call.1} parent=0 // pred_check
    _
  $region19: #{tpu_custom_call.1} parent=0 // pred_check_branch
    %130 = sbr.rel (0) target = $region21
  $region20: #{tpu_custom_call.1} parent=0 // pred_region
    _
  $region21: #{tpu_custom_call.1} parent=0 // pred_fallthru
    _

</llo_original>
